<compile_context>
chip_gen: v5e
topology: v5e:2x2
jax: 0.10.0
libtpu: 0.0.40
codegen_flags: <defaults>
</compile_context>

<pallas_src>
import jax
import jax.numpy as jnp
from jax.experimental import pallas as pl
from jax.experimental.pallas import tpu as pltpu


def _round_up(x, m):
    return (x + m - 1) // m * m


# ---------------- stage 1: seq_fts = seq @ W + fc_bias (computed once) -------
def fc_kernel(seq_ref, w_ref, b_ref, out_ref):
    sf = jnp.dot(seq_ref[...], w_ref[...], preferred_element_type=jnp.float32)
    sf = sf + b_ref[...]                       # f32 bias add
    out_ref[...] = sf.astype(out_ref.dtype)    # stored bf16 for stage 2


# -------- stage 2: out = PReLU(adj @ seq_fts + gcn_bias), tiled over (i, k) ---
def spmm_bias_prelu_kernel(adj_ref, sf_ref, bias_ref, a_ref, out_ref, acc_ref):
    k = pl.program_id(1)

    @pl.when(k == 0)
    def _():
        acc_ref[...] = jnp.zeros_like(acc_ref)

    acc_ref[...] += jnp.dot(adj_ref[...], sf_ref[...],
                            preferred_element_type=jnp.float32)

    @pl.when(k == pl.num_programs(1) - 1)
    def _():
        a = a_ref[0]                              # PReLU slope (SMEM scalar)
        out = acc_ref[...] + bias_ref[...]        # f32 epilogue
        out_ref[...] = jnp.where(out > 0, out, a * out).astype(out_ref.dtype)


def gcn_forward(seq, adj, w, fc_bias, gcn_bias, prelu_a):
    """seq: (N, in_ft), adj: (N, N), w: (in_ft, out_ft),
    fc_bias/gcn_bias: (out_ft,), prelu_a: scalar -> (N, out_ft) f32."""
    n, in_ft = seq.shape
    out_ft = w.shape[1]

    # ---- lane-dense / tile-aligned padding ----
    out_ft_p = _round_up(out_ft, 128)
    n_p = _round_up(n, 128)
    tm = 256 if (n_p % 256 == 0) else 128                       # adj row tile
    tk = 512 if (n_p % 512 == 0) else (256 if n_p % 256 == 0 else 128)  # K tile

    # bf16 streaming operands, f32 biases
    seq_p = jnp.zeros((n_p, in_ft), jnp.bfloat16).at[:n, :].set(
        seq.astype(jnp.bfloat16))
    adj_p = jnp.zeros((n_p, n_p), jnp.bfloat16).at[:n, :n].set(
        adj.astype(jnp.bfloat16))
    w_p = jnp.zeros((in_ft, out_ft_p), jnp.bfloat16).at[:, :out_ft].set(
        w.astype(jnp.bfloat16))
    fcb_p = jnp.zeros((1, out_ft_p), jnp.float32).at[0, :out_ft].set(
        fc_bias.astype(jnp.float32))
    gcb_p = jnp.zeros((1, out_ft_p), jnp.float32).at[0, :out_ft].set(
        gcn_bias.astype(jnp.float32))
    a1 = jnp.asarray(prelu_a, jnp.float32).reshape(1)

    # ---- stage 1: seq_fts (N_p, OUT_P), bf16 ----
    seq_fts = pl.pallas_call(
        fc_kernel,
        out_shape=jax.ShapeDtypeStruct((n_p, out_ft_p), jnp.bfloat16),
        grid_spec=pltpu.PrefetchScalarGridSpec(
            num_scalar_prefetch=0,
            grid=(n_p // tm,),
            in_specs=[
                pl.BlockSpec((tm, in_ft), lambda i: (i, 0)),        # seq rows
                pl.BlockSpec((in_ft, out_ft_p), lambda i: (0, 0)),  # W
                pl.BlockSpec((1, out_ft_p), lambda i: (0, 0)),      # fc bias
            ],
            out_specs=pl.BlockSpec((tm, out_ft_p), lambda i: (i, 0)),
        ),
        compiler_params=pltpu.CompilerParams(
            dimension_semantics=("parallel",)),
        cost_estimate=pl.CostEstimate(
            flops=2 * n_p * in_ft * out_ft_p,
            transcendentals=0,
            bytes_accessed=2 * n_p * in_ft + 2 * in_ft * out_ft_p
            + 2 * n_p * out_ft_p),
    )(seq_p, w_p, fcb_p)

    # ---- stage 2: tiled adj @ seq_fts + bias, PReLU ----
    out_p = pl.pallas_call(
        spmm_bias_prelu_kernel,
        out_shape=jax.ShapeDtypeStruct((n_p, out_ft_p), jnp.float32),
        grid_spec=pltpu.PrefetchScalarGridSpec(
            num_scalar_prefetch=0,
            grid=(n_p // tm, n_p // tk),
            in_specs=[
                pl.BlockSpec((tm, tk), lambda i, k: (i, k)),          # adj tile
                pl.BlockSpec((tk, out_ft_p), lambda i, k: (k, 0)),    # seq_fts
                pl.BlockSpec((1, out_ft_p), lambda i, k: (0, 0)),     # gcn bias
                pl.BlockSpec(memory_space=pltpu.MemorySpace.SMEM),    # PReLU a
            ],
            out_specs=pl.BlockSpec((tm, out_ft_p), lambda i, k: (i, 0)),
            scratch_shapes=[pltpu.VMEM((tm, out_ft_p), jnp.float32)],
        ),
        compiler_params=pltpu.CompilerParams(
            dimension_semantics=("parallel", "arbitrary")),
        cost_estimate=pl.CostEstimate(
            flops=2 * n_p * n_p * out_ft_p,
            transcendentals=0,
            bytes_accessed=2 * n_p * n_p
            + 2 * (n_p // tm) * n_p * out_ft_p
            + 4 * n_p * out_ft_p),
    )(adj_p, seq_fts, gcb_p, a1)

    return out_p[:n, :out_ft]


if __name__ == "__main__":
    # Small, module-consistent shapes: N nodes x in_ft features -> out_ft.
    N, IN_FT, OUT_FT = 8, 32, 32

    key = jax.random.PRNGKey(0)
    k_seq, k_adj, k_w = jax.random.split(key, 3)

    seq = jax.random.normal(k_seq, (N, IN_FT), dtype=jnp.float32)
    adj = jax.random.uniform(k_adj, (N, N), dtype=jnp.float32)

    # Deterministic parameter init mirroring the module's __init__:
    #  - fc.weight: xavier_normal_ with gain=1.414 (stored transposed)
    #  - fc.bias:   0.0
    #  - gcn bias:  0.001
    #  - PReLU:     default single slope 0.25
    gain = 1.414
    std = gain * (2.0 / (IN_FT + OUT_FT)) ** 0.5
    w = std * jax.random.normal(k_w, (IN_FT, OUT_FT), dtype=jnp.float32)
    fc_bias = jnp.zeros((OUT_FT,), dtype=jnp.float32)
    gcn_bias = jnp.full((OUT_FT,), 0.001, dtype=jnp.float32)
    prelu_a = 0.25

    out = gcn_forward(seq, adj, w, fc_bias, gcn_bias, prelu_a)
    jax.block_until_ready(out)

    # Pure-JAX reference mirroring the kernel's mixed precision
    # (bf16 operands, f32 accumulation, bf16 intermediate, f32 epilogue).
    seq_b = seq.astype(jnp.bfloat16)
    adj_b = adj.astype(jnp.bfloat16)
    w_b = w.astype(jnp.bfloat16)
    sf = (jnp.dot(seq_b, w_b, preferred_element_type=jnp.float32)
          + fc_bias).astype(jnp.bfloat16)
    ref = jnp.dot(adj_b, sf, preferred_element_type=jnp.float32) + gcn_bias
    ref = jnp.where(ref > 0, ref, prelu_a * ref)

    assert out.shape == (N, OUT_FT)
    assert jnp.allclose(out, ref, atol=1e-2, rtol=1e-2), float(
        jnp.max(jnp.abs(out - ref)))

    print("KERNEL_OK")
</pallas_src>

<mosaic_0001>
module attributes {stable_mosaic.version = 11 : i64} {
  func.func @fc_kernel(%arg0: i32, %arg1: memref<128x32xbf16, #tpu.memory_space<vmem>>, %arg2: memref<32x128xbf16, #tpu.memory_space<vmem>>, %arg3: memref<1x128xf32, #tpu.memory_space<vmem>>, %arg4: memref<128x128xbf16, #tpu.memory_space<vmem>>) attributes {dimension_semantics = [#tpu.dimension_semantics<parallel>], iteration_bounds = array<i64: 1>, scalar_prefetch = 0 : i64, scratch_operands = 0 : i64, tpu.core_type = #tpu.core_type<tc>, window_params = [{transform_indices = @transform_0, window_bounds = array<i64: 128, 32>}, {pipeline_mode = #tpu.pipeline_mode<synchronous>, transform_indices = @transform_1, window_bounds = array<i64: 32, 128>}, {pipeline_mode = #tpu.pipeline_mode<synchronous>, transform_indices = @transform_2, window_bounds = array<i64: 1, 128>}, {transform_indices = @transform_3, window_bounds = array<i64: 128, 128>}]} {
    %c0 = arith.constant 0 : index
    %c0_0 = arith.constant 0 : index
    %0 = vector.load %arg1[%c0, %c0_0] : memref<128x32xbf16, #tpu.memory_space<vmem>>, vector<128x32xbf16>
    %c0_1 = arith.constant 0 : index
    %c0_2 = arith.constant 0 : index
    %1 = vector.load %arg2[%c0_1, %c0_2] : memref<32x128xbf16, #tpu.memory_space<vmem>>, vector<32x128xbf16>
    %cst = arith.constant dense<0.000000e+00> : vector<128x128xf32>
    %2 = tpu.matmul %0, %1, %cst {dimension_numbers = #tpu.dot_dimension_numbers<[1], [0], [0], [1], [0, 0, 1, 1], [], []>} : vector<128x32xbf16>, vector<32x128xbf16>, vector<128x128xf32> -> vector<128x128xf32>
    %c0_3 = arith.constant 0 : index
    %c0_4 = arith.constant 0 : index
    %3 = vector.load %arg3[%c0_3, %c0_4] : memref<1x128xf32, #tpu.memory_space<vmem>>, vector<1x128xf32>
    %4 = vector.broadcast %3 : vector<1x128xf32> to vector<128x128xf32>
    %5 = arith.addf %2, %4 : vector<128x128xf32>
    %6 = arith.truncf %5 : vector<128x128xf32> to vector<128x128xbf16>
    %c0_5 = arith.constant 0 : index
    %c0_6 = arith.constant 0 : index
    %7 = vector.load %arg4[%c0_5, %c0_6] : memref<128x128xbf16, #tpu.memory_space<vmem>>, vector<128x128xbf16>
    tpu.vector_store %arg4[%c0_5, %c0_6], %6 {strides = array<i32>} : memref<128x128xbf16, #tpu.memory_space<vmem>>, vector<128x128xbf16>,
    return
  }
  func.func @transform_0(%arg0: i32) -> (i32, i32) {
    %c0_i32 = arith.constant 0 : i32
    %c0_i32_0 = arith.constant 0 : i32
    return %arg0, %c0_i32 : i32, i32
  }
  func.func @transform_1(%arg0: i32) -> (i32, i32) {
    %c0_i32 = arith.constant 0 : i32
    %c0_i32_0 = arith.constant 0 : i32
    %c0_i32_1 = arith.constant 0 : i32
    return %c0_i32, %c0_i32_0 : i32, i32
  }
  func.func @transform_2(%arg0: i32) -> (i32, i32) {
    %c0_i32 = arith.constant 0 : i32
    %c0_i32_0 = arith.constant 0 : i32
    %c0_i32_1 = arith.constant 0 : i32
    return %c0_i32, %c0_i32_0 : i32, i32
  }
  func.func @transform_3(%arg0: i32) -> (i32, i32) {
    %c0_i32 = arith.constant 0 : i32
    %c0_i32_0 = arith.constant 0 : i32
    return %arg0, %c0_i32 : i32, i32
  }
}

</mosaic_0001>

<llo_original>
// kernel: tpu_custom_call.1
$region0: #{tpu_custom_call.1}
  #allocation0 [shape = 'u32[]', space=smem, size = 0x4, offset = 0x4, fixed_abs, tag = 'smem constant byte address 0x4 - core index']
  #allocation1 [shape = 'u32[72,128]{1,0:T(1,128)}', space=vmem, size = 0x9000, scoped, tag = 'internal scratch']
  %s0 = inlined_call_operand.vmem [shape: bf16[128,32], index: 0, kind: input, shape index: {}]
  %s1 = inlined_call_operand.vmem [shape: bf16[32,128], index: 1, kind: input, shape index: {}]
  %s2 = inlined_call_operand.vmem [shape: f32[1,128], index: 2, kind: input, shape index: {}]
  %s3 = inlined_call_operand.hbm [shape: bf16[128,128], index: 3, kind: output, shape index: {}]
  %s4 = sld [smem:[#allocation0]]
  $region22: #{tpu_custom_call.1} parent=0
    _
  %s6 = ssub.s32 1, %s4
  %s7 = scalar_select 0, %s6, %s4
  $region1: #{tpu_custom_call.1} parent=0
    #allocation2 [shape = 'u8[32768]{0}', space=vmem, size = 0x8000, scoped, tag = 'output window, operand 0, single buffered']
    #allocation3 [shape = 's32[1]{0}', space=sflag, size = 0x4, scoped, tag = 'scoped memory for tpu_custom_call.1']
    %8 = vsyncpa [#allocation3], 0
    // Predicated region
    $region2: #{tpu_custom_call.1} parent=1 // pred_check
      _
    $region3: #{tpu_custom_call.1} parent=1 // pred_check_branch
      %10 = sbr.rel (0) target = $region5
    $region4: #{tpu_custom_call.1} parent=1 // pred_region
      _
    $region5: #{tpu_custom_call.1} parent=1 // pred_fallthru
      _
    // Predicated region
    $region6: #{tpu_custom_call.1} parent=1 // pred_check
      _
    $region7: #{tpu_custom_call.1} parent=1 // pred_check_branch
      %12 = sbr.rel (0) target = $region9
    $region8: #{tpu_custom_call.1} parent=1 // pred_region
      _
    $region9: #{tpu_custom_call.1} parent=1 // pred_fallthru
      _
    // Predicated region
    $region10: #{tpu_custom_call.1} parent=1 // pred_check
      _
    $region11: #{tpu_custom_call.1} parent=1 // pred_check_branch
      %14 = sbr.rel (0) target = $region13
    $region12: #{tpu_custom_call.1} parent=1 // pred_region
      _
    $region13: #{tpu_custom_call.1} parent=1 // pred_fallthru
      _
    %v16 = vld [vmem:[%s0] sm:$0xf]
    %v17 = vld [vmem:[%s0 + $0x4] sm:$0xf]
    %v18 = vld [vmem:[%s0 + $0x8] sm:$0xf]
    %v19 = vld [vmem:[%s0 + $0xc] sm:$0xf]
    %v20 = vld [vmem:[%s0 + $0x10] sm:$0xf]
    %v21 = vld [vmem:[%s0 + $0x14] sm:$0xf]
    %v22 = vld [vmem:[%s0 + $0x18] sm:$0xf]
    %v23 = vld [vmem:[%s0 + $0x1c] sm:$0xf]
    %v24 = vld [vmem:[%s0 + $0x20] sm:$0xf]
    %v25 = vld [vmem:[%s0 + $0x24] sm:$0xf]
    %v26 = vld [vmem:[%s0 + $0x28] sm:$0xf]
    %v27 = vld [vmem:[%s0 + $0x2c] sm:$0xf]
    %v28 = vld [vmem:[%s0 + $0x30] sm:$0xf]
    %v29 = vld [vmem:[%s0 + $0x34] sm:$0xf]
    %v30 = vld [vmem:[%s0 + $0x38] sm:$0xf]
    %v31 = vld [vmem:[%s0 + $0x3c] sm:$0xf]
    %v32 = vld [vmem:[%s1] sm:$0xf]
    %v33 = vld [vmem:[%s1 + $0x4] sm:$0xf]
    %v34 = vld [vmem:[%s1 + $0x8] sm:$0xf]
    %v35 = vld [vmem:[%s1 + $0xc] sm:$0xf]
    %v36 = vld [vmem:[%s2] sm:$0x1]
    %v38 = vperm.slane %v36, 0
    %v56 = vunpack.c.l.b16 %v16
    %v57 = vunpack.c.l.b16 %v17
    %v58 = vunpack.c.l.b16 %v18
    %v59 = vunpack.c.l.b16 %v19
    %v60 = vunpack.c.l.b16 %v20
    %v61 = vunpack.c.l.b16 %v21
    %v62 = vunpack.c.l.b16 %v22
    %v63 = vunpack.c.l.b16 %v23
    %v64 = vunpack.c.l.b16 %v24
    %v65 = vunpack.c.l.b16 %v25
    %v66 = vunpack.c.l.b16 %v26
    %v67 = vunpack.c.l.b16 %v27
    %v68 = vunpack.c.l.b16 %v28
    %v69 = vunpack.c.l.b16 %v29
    %v70 = vunpack.c.l.b16 %v30
    %v71 = vunpack.c.l.b16 %v31
    %v72 = vpack.c.b16 %v57, %v56
    %v73 = vpack.c.b16 %v59, %v58
    %v74 = vpack.c.b16 %v61, %v60
    %v75 = vpack.c.b16 %v63, %v62
    %v76 = vpack.c.b16 %v65, %v64
    %v77 = vpack.c.b16 %v67, %v66
    %v78 = vpack.c.b16 %v69, %v68
    %v79 = vpack.c.b16 %v71, %v70
    %v84 = vunpack.c.l.b16 %v32
    %v85 = vunpack.c.l.b16 %v33
    %v86 = vunpack.c.l.b16 %v34
    %v87 = vunpack.c.l.b16 %v35
    %v88 = vpack.c.b16 %v85, %v84
    %v89 = vpack.c.b16 %v87, %v86
    %vm92 = vcmask 261120
    %v94 = vsel %vm92, %v72, 0
    %v97 = vsel %vm92, %v73, 0
    %v100 = vsel %vm92, %v74, 0
    %v103 = vsel %vm92, %v75, 0
    %v106 = vsel %vm92, %v76, 0
    %v109 = vsel %vm92, %v77, 0
    %v112 = vsel %vm92, %v78, 0
    %v115 = vsel %vm92, %v79, 0
    %117 = vmatpush.bf16.msra.mxu0 0
    %118 = vmatpush.bf16.msra.mxu0 0
    %119 = vmatpush.bf16.msra.mxu0 0
    %120 = vmatpush.bf16.msra.mxu0 0
    %121 = vmatpush.bf16.msra.mxu0 0
    %122 = vmatpush.bf16.msra.mxu0 0
    %123 = vmatpush.bf16.msra.mxu0 %v89
    %124 = vmatpush.bf16.msra.mxu0 %v88
    %125 = vmatmul.bf16.gmra.mxu0 %v94
    %v126 = vpop.f32.mrf.mxu0
    %v127 = vadd.f32 %v38, %v126
    %v128 = vpop.f32.mrf.mxu0
    %v129 = vadd.f32 %v38, %v128
    %130 = vmatmul.bf16.gmra.mxu0 %v97
    %v131 = vpop.f32.mrf.mxu0
    %v132 = vadd.f32 %v38, %v131
    %v133 = vpop.f32.mrf.mxu0
    %v134 = vadd.f32 %v38, %v133
    %135 = vmatmul.bf16.gmra.mxu0 %v100
    %v136 = vpop.f32.mrf.mxu0
    %v137 = vadd.f32 %v38, %v136
    %v138 = vpop.f32.mrf.mxu0
    %v139 = vadd.f32 %v38, %v138
    %140 = vmatmul.bf16.gmra.mxu0 %v103
    %v141 = vpop.f32.mrf.mxu0
    %v142 = vadd.f32 %v38, %v141
    %v143 = vpop.f32.mrf.mxu0
    %v144 = vadd.f32 %v38, %v143
    %145 = vmatmul.bf16.gmra.mxu0 %v106
    %v146 = vpop.f32.mrf.mxu0
    %v147 = vadd.f32 %v38, %v146
    %v148 = vpop.f32.mrf.mxu0
    %v149 = vadd.f32 %v38, %v148
    %150 = vmatmul.bf16.gmra.mxu0 %v109
    %v151 = vpop.f32.mrf.mxu0
    %v152 = vadd.f32 %v38, %v151
    %v153 = vpop.f32.mrf.mxu0
    %v154 = vadd.f32 %v38, %v153
    %155 = vmatmul.bf16.gmra.mxu0 %v112
    %v156 = vpop.f32.mrf.mxu0
    %v157 = vadd.f32 %v38, %v156
    %v158 = vpop.f32.mrf.mxu0
    %v159 = vadd.f32 %v38, %v158
    %160 = vmatmul.bf16.gmra.mxu0 %v115
    %v161 = vpop.f32.mrf.mxu0
    %v162 = vadd.f32 %v38, %v161
    %v163 = vpop.f32.mrf.mxu0
    %v164 = vadd.f32 %v38, %v163
    %165 = vdwg.mxu0
    %v166 = vpack.c.bf16 %v127, %v127
    %v167 = vpack.c.bf16 %v129, %v129
    %v168 = vpack.c.bf16 %v132, %v132
    %v169 = vpack.c.bf16 %v134, %v134
    %v170 = vpack.c.bf16 %v137, %v137
    %v171 = vpack.c.bf16 %v139, %v139
    %v172 = vpack.c.bf16 %v142, %v142
    %v173 = vpack.c.bf16 %v144, %v144
    %v174 = vpack.c.bf16 %v147, %v147
    %v175 = vpack.c.bf16 %v149, %v149
    %v176 = vpack.c.bf16 %v152, %v152
    %v177 = vpack.c.bf16 %v154, %v154
    %v178 = vpack.c.bf16 %v157, %v157
    %v179 = vpack.c.bf16 %v159, %v159
    %v180 = vpack.c.bf16 %v162, %v162
    %v181 = vpack.c.bf16 %v164, %v164
    %182 = vst [vmem:[#allocation2] sm:$0xf] %v166
    %183 = vst [vmem:[#allocation2 + $0x4] sm:$0xf] %v167
    %184 = vst [vmem:[#allocation2 + $0x8] sm:$0xf] %v168
    %185 = vst [vmem:[#allocation2 + $0xc] sm:$0xf] %v169
    %186 = vst [vmem:[#allocation2 + $0x10] sm:$0xf] %v170
    %187 = vst [vmem:[#allocation2 + $0x14] sm:$0xf] %v171
    %188 = vst [vmem:[#allocation2 + $0x18] sm:$0xf] %v172
    %189 = vst [vmem:[#allocation2 + $0x1c] sm:$0xf] %v173
    %190 = vst [vmem:[#allocation2 + $0x20] sm:$0xf] %v174
    %191 = vst [vmem:[#allocation2 + $0x24] sm:$0xf] %v175
    %192 = vst [vmem:[#allocation2 + $0x28] sm:$0xf] %v176
    %193 = vst [vmem:[#allocation2 + $0x2c] sm:$0xf] %v177
    %194 = vst [vmem:[#allocation2 + $0x30] sm:$0xf] %v178
    %195 = vst [vmem:[#allocation2 + $0x34] sm:$0xf] %v179
    %196 = vst [vmem:[#allocation2 + $0x38] sm:$0xf] %v180
    %197 = vst [vmem:[#allocation2 + $0x3c] sm:$0xf] %v181
    // Predicated region
    $region14: #{tpu_custom_call.1} parent=1 // pred_check
      _
    $region15: #{tpu_custom_call.1} parent=1 // pred_check_branch
      %199 = sbr.rel (0) target = $region17
    $region16: #{tpu_custom_call.1} parent=1 // pred_region
      %201 = vsyncadd [#allocation3], 0
      %s202 = sshll.u32 [#allocation2], 4
      %s203 = int_to_ptr.vmem [resolvable:$true] %s202
      %s204 = sshll.u32 %s3, 4
      %s205 = int_to_ptr.hbm [resolvable:$true] %s204
      %210 = dma.vmem_to_hbm [thread:$0]  %s203, 1024, %s205, [#allocation3], 64, 64, 4
    $region17: #{tpu_custom_call.1} parent=1 // pred_fallthru
      _
    // Predicated region
    $region18: #{tpu_custom_call.1} parent=1 // pred_check
      _
    $region19: #{tpu_custom_call.1} parent=1 // pred_check_branch
      %212 = sbr.rel (0) target = $region21
    $region20: #{tpu_custom_call.1} parent=1 // pred_region
      %214 = dma.done [#allocation3], 1024
    $region21: #{tpu_custom_call.1} parent=1 // pred_fallthru
      _
    %215 = vsyncpa [#allocation3], 1

</llo_original>
